<compile_context>
chip_gen: v7x
topology: tpu7x:2x2x1
jax: 0.10.0
libtpu: 0.0.40
codegen_flags: <defaults>
</compile_context>

<pallas_src>
import functools

import jax
import jax.numpy as jnp
from jax import lax
from jax.experimental import pallas as pl
from jax.experimental.pallas import tpu as pltpu

# ----------------------------- "cfg" constants ------------------------------
FOV_MAP_SCALE = 4
PATCH_AP = 1
PATCH_BANK = (8, 16, 32)          # one crop size per fovea scale
PATCH_SIZE = (8, 8)               # every scale is resized to this (ph, pw)


def _round_up(x, m):
    return ((x + m - 1) // m) * m


# ============================ Pallas kernel A ================================
# Synthetic foveater net: per-pixel 1x1 conv (C -> S) + softmax over scales.
# Layout: pixels on the 128-lane axis, channels/scales on sublanes. The tiny
# (C, S) weight matrix lives in SMEM and the contraction is C*S VPU FMAs
# (the MXU would be >98% padding for a 3x3 contraction).
def _foveater_kernel(w_ref, b_ref, x_ref, o_ref, *, num_c, num_s):
    # w_ref: SMEM (C*S,)   b_ref: SMEM (S,)
    # x_ref: VMEM (1, C, T) pixels-on-lanes   o_ref: VMEM (1, S, T)
    x = x_ref[0].astype(jnp.float32)                    # (C, T)
    t = x.shape[-1]
    logit_rows = []
    for s in range(num_s):
        acc = jnp.full((1, t), b_ref[s], jnp.float32)
        for c in range(num_c):
            acc = acc + w_ref[c * num_s + s] * x[c:c + 1, :]
        logit_rows.append(acc)                          # (1, T)
    # softmax over the small static scale axis: pairwise VPU max/add + EUP exp
    m = logit_rows[0]
    for s in range(1, num_s):
        m = jnp.maximum(m, logit_rows[s])
    exps = [jnp.exp(r - m) for r in logit_rows]
    denom = exps[0]
    for s in range(1, num_s):
        denom = denom + exps[s]
    inv = pl.reciprocal(denom, approx=True)
    out = jnp.concatenate([e * inv for e in exps], axis=0)   # (S, T)
    o_ref[0] = out.astype(o_ref.dtype)


def foveater_forward(x_lr, w, b):
    """x_lr: (N, C, Hl, Wl) NCHW -> F_Xlr: (N, S, Hl, Wl) softmax over S."""
    n, c, hl, wl = x_lr.shape
    s = int(b.shape[0])
    p = hl * wl
    t = min(512, _round_up(p, 128))        # lane-dense pixel tile (multiple of 128)
    p_pad = _round_up(p, t)
    xf = x_lr.reshape(n, c, p)
    if p_pad != p:
        xf = jnp.pad(xf, ((0, 0), (0, 0), (0, p_pad - p)))
    out = pl.pallas_call(
        functools.partial(_foveater_kernel, num_c=c, num_s=s),
        out_shape=jax.ShapeDtypeStruct((n, s, p_pad), jnp.float32),
        grid=(n, p_pad // t),
        in_specs=[
            pl.BlockSpec(memory_space=pltpu.MemorySpace.SMEM),        # flat (C*S,) weights
            pl.BlockSpec(memory_space=pltpu.MemorySpace.SMEM),        # (S,) bias
            pl.BlockSpec((1, c, t), lambda i, j: (i, 0, j)),          # pixel tile
        ],
        out_specs=pl.BlockSpec((1, s, t), lambda i, j: (i, 0, j)),
        compiler_params=pltpu.CompilerParams(
            dimension_semantics=("parallel", "parallel")),
    )(w.reshape(-1), b, xf)
    return out[:, :, :p].reshape(n, s, hl, wl)


# ============================ Pallas kernel B ================================
# hard_fov path: per (location, batch) row -> argmax over scales of F_Xlr_i,
# build the 0/1 one-hot (F_Xlr_i_hard) and reduce the flattened patch pyramid
# over S. Rows are processed in lane-dense batches.
def _hard_weighted_avg_kernel(w_ref, p_ref, o_ref, *, num_scales):
    # w_ref: VMEM (Rt, S) soft fovea scores (row = loc*N + batch)
    # p_ref: VMEM (Rt, S, D) flattened patch pyramids (D = C*ph*pw)
    # o_ref: VMEM (Rt, D)
    w = w_ref[...].astype(jnp.float32)
    # torch.max over dim=1: first max index wins on ties (strict '>' keeps first)
    best_val = w[:, 0:1]
    best_idx = jnp.zeros_like(best_val, dtype=jnp.int32)
    for s in range(1, num_scales):
        v = w[:, s:s + 1]
        better = v > best_val
        best_val = jnp.where(better, v, best_val)
        best_idx = jnp.where(better, jnp.int32(s), best_idx)
    # weighted sum over scales with hard one-hot weights (== select argmax patch)
    acc = jnp.zeros(o_ref.shape, jnp.float32)
    for s in range(num_scales):
        sel = (best_idx == s).astype(jnp.float32)            # (Rt, 1)
        acc = acc + sel * p_ref[:, s, :].astype(jnp.float32)
    o_ref[...] = acc.astype(o_ref.dtype)


def hard_weighted_average(weights, patches):
    """weights: (R, S) soft scores; patches: (R, S, D) -> (R, D)."""
    r, s = weights.shape
    d = patches.shape[-1]
    rt = min(128, _round_up(r, 8))         # rows per grid step (multiple of 8)
    r_pad = _round_up(r, rt)
    if r_pad != r:
        weights = jnp.pad(weights, ((0, r_pad - r), (0, 0)))
        patches = jnp.pad(patches, ((0, r_pad - r), (0, 0), (0, 0)))
    out = pl.pallas_call(
        functools.partial(_hard_weighted_avg_kernel, num_scales=s),
        out_shape=jax.ShapeDtypeStruct((r_pad, d), jnp.float32),
        grid=(r_pad // rt,),
        in_specs=[
            pl.BlockSpec((rt, s), lambda i: (i, 0)),
            pl.BlockSpec((rt, s, d), lambda i: (i, 0, 0)),
        ],
        out_specs=pl.BlockSpec((rt, d), lambda i: (i, 0)),
        compiler_params=pltpu.CompilerParams(dimension_semantics=("parallel",)),
    )(weights, patches)
    return out[:r]


# ================================ JAX glue ===================================
# TODO(synk): b_imresize / patch_loader sources are not provided; they are
# approximated with jax.image.resize + dynamic_slice crops around the fovea.
def _patch_loader(X, Y, xi_i, yi_i):
    """Traced (xi_i, yi_i) scalars -> (N, S, C, ph, pw) patches, (N, ph, pw) labels."""
    n, c, h, w = X.shape
    ph, pw = PATCH_SIZE
    cx = (xi_i * FOV_MAP_SCALE).astype(jnp.int32)
    cy = (yi_i * FOV_MAP_SCALE * PATCH_AP).astype(jnp.int32)
    zero = jnp.int32(0)
    patches = []
    for size in PATCH_BANK:
        sw = size * PATCH_AP
        x0 = jnp.clip(cx - size // 2, 0, h - size).astype(jnp.int32)
        y0 = jnp.clip(cy - sw // 2, 0, w - sw).astype(jnp.int32)
        crop = lax.dynamic_slice(X, (zero, zero, x0, y0), (n, c, size, sw))
        patches.append(jax.image.resize(crop, (n, c, ph, pw), method="bilinear"))
    X_patches = jnp.stack(patches, axis=1)                    # (N, S, C, ph, pw)
    # seg label patch at the base scale (nearest), as int labels
    s0 = PATCH_BANK[0]
    x0 = jnp.clip(cx - s0 // 2, 0, h - s0).astype(jnp.int32)
    y0 = jnp.clip(cy - s0 // 2, 0, w - s0 * PATCH_AP).astype(jnp.int32)
    seg = lax.dynamic_slice(Y, (zero, x0, y0), (n, s0, s0 * PATCH_AP))
    seg_label = jax.image.resize(
        seg.astype(jnp.float32), (n, ph, pw), method="nearest").astype(Y.dtype)
    return X_patches, seg_label


def fov_segmentation_forward(batch_data, params):
    xi, yi, rand_location, fov_location_batch_step = batch_data["cor_info"]
    X, Y = batch_data["img_data"], batch_data["seg_label"]
    n, c, h, w = X.shape

    # X_lr = b_imresize(X, (H/scale, W/(scale*patch_ap)), 'bilinear')
    hl = round(h / FOV_MAP_SCALE)
    wl = round(w / (FOV_MAP_SCALE * PATCH_AP))
    X_lr = jax.image.resize(X, (n, c, hl, wl), method="bilinear")

    # F_Xlr, print_grad = foveater(X_lr, reset_grad=False, train_mode=True)
    F_Xlr = foveater_forward(X_lr, params["fov_w"], params["fov_b"])   # (N, S, Hl, Wl)
    print_grad = jnp.zeros_like(F_Xlr)
    # TODO(synk): register_hook / modify_argmax_grad are backward-pass hooks (no fwd effect)

    # F_Xlr_i = F_Xlr[:, :, xi, yi]   -> (N, S, L)
    F_Xlr_i = F_Xlr[:, :, xi, yi]
    L = int(xi.shape[0])
    s = F_Xlr.shape[1]
    ph, pw = PATCH_SIZE

    # Batched (vmapped) patch loader over fovea locations: traced indices only,
    # no host sync / per-location recompiles.
    X_patches_all, seg_all = jax.vmap(
        lambda a, b: _patch_loader(X, Y, a, b))(xi, yi)
    # X_patches_all: (L, N, S, C, ph, pw); seg_all: (L, N, ph, pw)

    # rows ordered exactly like the torch concatenation: [loc0 batch, loc1 batch, ...]
    patches_flat = X_patches_all.reshape(L * n, s, c * ph * pw)          # (L*N, S, D)
    weights_flat = jnp.transpose(F_Xlr_i, (2, 0, 1)).reshape(L * n, s)   # (L*N, S)

    wavg = hard_weighted_average(weights_flat, patches_flat)             # (L*N, D)
    weighted_average_mb = wavg.reshape(L * n, c, ph, pw)
    seg_label_mb = seg_all.reshape(L * n, ph, pw)

    patch_data = {"seg_label": seg_label_mb, "img_data": weighted_average_mb}
    if fov_location_batch_step == rand_location:
        return patch_data, F_Xlr, print_grad
    return patch_data, F_Xlr


# ================================== main =====================================
if __name__ == "__main__":
    key = jax.random.PRNGKey(0)
    k1, k2, k3, k4 = jax.random.split(key, 4)

    N, C, H, W = 2, 3, 32, 32
    S = len(PATCH_BANK)

    X = jax.random.normal(k1, (N, C, H, W), dtype=jnp.float32)
    Y = jax.random.randint(k2, (N, H, W), 0, 5).astype(jnp.int32)

    # deterministic synthetic foveater params (1x1 conv C->S)
    params = {
        "fov_w": 0.5 * jax.random.normal(k3, (C, S), dtype=jnp.float32),
        "fov_b": 0.1 * jax.random.normal(k4, (S,), dtype=jnp.float32),
    }

    xi = jnp.array([2, 5], dtype=jnp.int32)
    yi = jnp.array([3, 6], dtype=jnp.int32)
    batch_data = {
        "img_data": X,
        "seg_label": Y,
        "cor_info": (xi, yi, 0, 0),   # rand_location == fov_location_batch_step
    }

    patch_data, F_Xlr, print_grad = fov_segmentation_forward(batch_data, params)
    jax.block_until_ready((patch_data["img_data"], patch_data["seg_label"], F_Xlr, print_grad))

    assert patch_data["img_data"].shape == (len(xi) * N, C, PATCH_SIZE[0], PATCH_SIZE[1])
    assert patch_data["seg_label"].shape == (len(xi) * N, PATCH_SIZE[0], PATCH_SIZE[1])
    assert F_Xlr.shape == (N, S, H // FOV_MAP_SCALE, W // (FOV_MAP_SCALE * PATCH_AP))
    # softmax rows must sum to ~1 over the scale axis
    assert jnp.allclose(jnp.sum(F_Xlr, axis=1), 1.0, atol=1e-2)
    print("KERNEL_OK")
</pallas_src>

<mosaic_0001>
module attributes {stable_mosaic.version = 11 : i64} {
  func.func @_foveater_kernel(%arg0: i32, %arg1: i32, %arg2: memref<9xf32, #tpu.memory_space<smem>>, %arg3: memref<3xf32, #tpu.memory_space<smem>>, %arg4: memref<1x3x128xf32, #tpu.memory_space<vmem>>, %arg5: memref<1x3x128xf32, #tpu.memory_space<vmem>>) attributes {dimension_semantics = [#tpu.dimension_semantics<parallel>, #tpu.dimension_semantics<parallel>], iteration_bounds = array<i64: 2, 1>, scalar_prefetch = 0 : i64, scratch_operands = 0 : i64, tpu.core_type = #tpu.core_type<tc>, window_params = [{transform_indices = @transform_0, window_bounds = array<i64: 9>}, {transform_indices = @transform_1, window_bounds = array<i64: 3>}, {transform_indices = @transform_2, window_bounds = array<i64: 1, 3, 128>}, {transform_indices = @transform_3, window_bounds = array<i64: 1, 3, 128>}]} {
    %c0 = arith.constant 0 : index
    %c0_0 = arith.constant 0 : index
    %c0_1 = arith.constant 0 : index
    %0 = vector.load %arg4[%c0, %c0_0, %c0_1] : memref<1x3x128xf32, #tpu.memory_space<vmem>>, vector<1x3x128xf32>
    %1 = vector.shape_cast %0 : vector<1x3x128xf32> to vector<3x128xf32>
    %c0_2 = arith.constant 0 : index
    %2 = memref.load %arg3[%c0_2] : memref<3xf32, #tpu.memory_space<smem>>
    %3 = vector.broadcast %2 : f32 to vector<1x128xf32>
    %c0_3 = arith.constant 0 : index
    %4 = memref.load %arg2[%c0_3] : memref<9xf32, #tpu.memory_space<smem>>
    %5 = vector.extract_strided_slice %1 {offsets = [0, 0], sizes = [1, 128], strides = [1, 1]} : vector<3x128xf32> to vector<1x128xf32>
    %6 = vector.broadcast %4 : f32 to vector<1x128xf32>
    %7 = arith.mulf %6, %5 : vector<1x128xf32>
    %8 = arith.addf %3, %7 : vector<1x128xf32>
    %c3 = arith.constant 3 : index
    %9 = memref.load %arg2[%c3] : memref<9xf32, #tpu.memory_space<smem>>
    %10 = vector.extract_strided_slice %1 {offsets = [1, 0], sizes = [1, 128], strides = [1, 1]} : vector<3x128xf32> to vector<1x128xf32>
    %11 = vector.broadcast %9 : f32 to vector<1x128xf32>
    %12 = arith.mulf %11, %10 : vector<1x128xf32>
    %13 = arith.addf %8, %12 : vector<1x128xf32>
    %c6 = arith.constant 6 : index
    %14 = memref.load %arg2[%c6] : memref<9xf32, #tpu.memory_space<smem>>
    %15 = vector.extract_strided_slice %1 {offsets = [2, 0], sizes = [1, 128], strides = [1, 1]} : vector<3x128xf32> to vector<1x128xf32>
    %16 = vector.broadcast %14 : f32 to vector<1x128xf32>
    %17 = arith.mulf %16, %15 : vector<1x128xf32>
    %18 = arith.addf %13, %17 : vector<1x128xf32>
    %c1 = arith.constant 1 : index
    %19 = memref.load %arg3[%c1] : memref<3xf32, #tpu.memory_space<smem>>
    %20 = vector.broadcast %19 : f32 to vector<1x128xf32>
    %c1_4 = arith.constant 1 : index
    %21 = memref.load %arg2[%c1_4] : memref<9xf32, #tpu.memory_space<smem>>
    %22 = vector.extract_strided_slice %1 {offsets = [0, 0], sizes = [1, 128], strides = [1, 1]} : vector<3x128xf32> to vector<1x128xf32>
    %23 = vector.broadcast %21 : f32 to vector<1x128xf32>
    %24 = arith.mulf %23, %22 : vector<1x128xf32>
    %25 = arith.addf %20, %24 : vector<1x128xf32>
    %c4 = arith.constant 4 : index
    %26 = memref.load %arg2[%c4] : memref<9xf32, #tpu.memory_space<smem>>
    %27 = vector.extract_strided_slice %1 {offsets = [1, 0], sizes = [1, 128], strides = [1, 1]} : vector<3x128xf32> to vector<1x128xf32>
    %28 = vector.broadcast %26 : f32 to vector<1x128xf32>
    %29 = arith.mulf %28, %27 : vector<1x128xf32>
    %30 = arith.addf %25, %29 : vector<1x128xf32>
    %c7 = arith.constant 7 : index
    %31 = memref.load %arg2[%c7] : memref<9xf32, #tpu.memory_space<smem>>
    %32 = vector.extract_strided_slice %1 {offsets = [2, 0], sizes = [1, 128], strides = [1, 1]} : vector<3x128xf32> to vector<1x128xf32>
    %33 = vector.broadcast %31 : f32 to vector<1x128xf32>
    %34 = arith.mulf %33, %32 : vector<1x128xf32>
    %35 = arith.addf %30, %34 : vector<1x128xf32>
    %c2 = arith.constant 2 : index
    %36 = memref.load %arg3[%c2] : memref<3xf32, #tpu.memory_space<smem>>
    %37 = vector.broadcast %36 : f32 to vector<1x128xf32>
    %c2_5 = arith.constant 2 : index
    %38 = memref.load %arg2[%c2_5] : memref<9xf32, #tpu.memory_space<smem>>
    %39 = vector.extract_strided_slice %1 {offsets = [0, 0], sizes = [1, 128], strides = [1, 1]} : vector<3x128xf32> to vector<1x128xf32>
    %40 = vector.broadcast %38 : f32 to vector<1x128xf32>
    %41 = arith.mulf %40, %39 : vector<1x128xf32>
    %42 = arith.addf %37, %41 : vector<1x128xf32>
    %c5 = arith.constant 5 : index
    %43 = memref.load %arg2[%c5] : memref<9xf32, #tpu.memory_space<smem>>
    %44 = vector.extract_strided_slice %1 {offsets = [1, 0], sizes = [1, 128], strides = [1, 1]} : vector<3x128xf32> to vector<1x128xf32>
    %45 = vector.broadcast %43 : f32 to vector<1x128xf32>
    %46 = arith.mulf %45, %44 : vector<1x128xf32>
    %47 = arith.addf %42, %46 : vector<1x128xf32>
    %c8 = arith.constant 8 : index
    %48 = memref.load %arg2[%c8] : memref<9xf32, #tpu.memory_space<smem>>
    %49 = vector.extract_strided_slice %1 {offsets = [2, 0], sizes = [1, 128], strides = [1, 1]} : vector<3x128xf32> to vector<1x128xf32>
    %50 = vector.broadcast %48 : f32 to vector<1x128xf32>
    %51 = arith.mulf %50, %49 : vector<1x128xf32>
    %52 = arith.addf %47, %51 : vector<1x128xf32>
    %53 = arith.maximumf %18, %35 : vector<1x128xf32>
    %54 = arith.maximumf %53, %52 : vector<1x128xf32>
    %55 = arith.subf %18, %54 : vector<1x128xf32>
    %56 = math.exp %55 : vector<1x128xf32>
    %57 = arith.subf %35, %54 : vector<1x128xf32>
    %58 = math.exp %57 : vector<1x128xf32>
    %59 = arith.subf %52, %54 : vector<1x128xf32>
    %60 = math.exp %59 : vector<1x128xf32>
    %61 = arith.addf %56, %58 : vector<1x128xf32>
    %62 = arith.addf %61, %60 : vector<1x128xf32>
    %63 = tpu.reciprocal %62 {approx = true} : vector<1x128xf32> -> vector<1x128xf32>
    %64 = arith.mulf %56, %63 : vector<1x128xf32>
    %65 = arith.mulf %58, %63 : vector<1x128xf32>
    %66 = arith.mulf %60, %63 : vector<1x128xf32>
    %67 = tpu.concatenate %64, %65, %66 in 0 : vector<1x128xf32>, vector<1x128xf32>, vector<1x128xf32> -> vector<3x128xf32>
    %c0_6 = arith.constant 0 : index
    %c0_7 = arith.constant 0 : index
    %c0_8 = arith.constant 0 : index
    %68 = vector.load %arg5[%c0_6, %c0_7, %c0_8] : memref<1x3x128xf32, #tpu.memory_space<vmem>>, vector<1x3x128xf32>
    %69 = vector.shape_cast %68 : vector<1x3x128xf32> to vector<3x128xf32>
    %70 = vector.shape_cast %67 : vector<3x128xf32> to vector<1x3x128xf32>
    tpu.vector_store %arg5[%c0_6, %c0_7, %c0_8], %70 {strides = array<i32>} : memref<1x3x128xf32, #tpu.memory_space<vmem>>, vector<1x3x128xf32>,
    return
  }
  func.func @transform_0(%arg0: i32, %arg1: i32) -> i32 {
    %c0_i32 = arith.constant 0 : i32
    %c0_i32_0 = arith.constant 0 : i32
    return %c0_i32 : i32
  }
  func.func @transform_1(%arg0: i32, %arg1: i32) -> i32 {
    %c0_i32 = arith.constant 0 : i32
    %c0_i32_0 = arith.constant 0 : i32
    return %c0_i32 : i32
  }
  func.func @transform_2(%arg0: i32, %arg1: i32) -> (i32, i32, i32) {
    %c0_i32 = arith.constant 0 : i32
    %c0_i32_0 = arith.constant 0 : i32
    return %arg0, %c0_i32, %arg1 : i32, i32, i32
  }
  func.func @transform_3(%arg0: i32, %arg1: i32) -> (i32, i32, i32) {
    %c0_i32 = arith.constant 0 : i32
    %c0_i32_0 = arith.constant 0 : i32
    return %arg0, %c0_i32, %arg1 : i32, i32, i32
  }
}

</mosaic_0001>

<llo_original>
// kernel: tpu_custom_call.1
$region0: #{tpu_custom_call.1}
  #allocation0 [shape = 'u32[]', space=smem, size = 0x4, offset = 0x4, fixed_abs, tag = 'smem constant byte address 0x4 - core index']
  #allocation1 [shape = 'u32[144,128]{1,0:T(1,128)}', space=vmem, size = 0x12000, scoped, tag = 'internal scratch']
  %s0 = inlined_call_operand.vmem [shape: f32[9], index: 0, kind: input, shape index: {}]
  %s1 = inlined_call_operand.vmem [shape: f32[3], index: 1, kind: input, shape index: {}]
  %s2 = inlined_call_operand.vmem [shape: f32[2,3,128], index: 2, kind: input, shape index: {}]
  %s3 = inlined_call_operand.vmem [shape: f32[2,3,128], index: 3, kind: output, shape index: {}]
  %s4 = sld [smem:[#allocation0]]
  $region53: #{tpu_custom_call.1} parent=0
    _
  %s6 = ssub.s32 1, %s4
  %s7 = scalar_select 0, %s6, %s4
  $region1: #{tpu_custom_call.1} parent=0
    #allocation2 [shape = 'u8[512]{0}', space=smem, size = 0x200, scoped, tag = 'input window, operand 0, single buffered']
    #allocation3 [shape = 's32[2]{0}', space=sflag, size = 0x8, scoped, tag = 'scoped memory for tpu_custom_call.1']
    #allocation4 [shape = 'u8[512]{0}', space=smem, size = 0x200, scoped, tag = 'input window, operand 1, single buffered']
    #allocation5 [shape = 's32[1]{0}', space=sflag, size = 0x4, scoped, tag = 'scoped memory for tpu_custom_call.1']
    %8 = vsyncpa [#allocation3], 0
    %9 = vsyncpa [#allocation5], 0
    loop: start=0, step=1, limit=4
    $region2: #{tpu_custom_call.1} parent=1 // loop_pre_header
      _
    $region3: #{tpu_custom_call.1} parent=1 // loop_header
      %s11 = sphi 0, %s15
      %p12 = scmp.ge.s32.totalorder %s11, 4
      %s18 = sphi 0, %s30
      %s19 = sphi 0, %s26
      %s20 = sphi 0, %s18
      %s21 = sphi 0, %s19
      %s22 = sphi 0, %s20
      %s23 = sphi 0, %s21
      %s31 = sphi 0, %s31
      %s33 = sphi 0, %s31
      %s34 = sphi 0, %s33
      %s48 = sphi 0, %s34
      %s52 = sphi 0, %s52
      %s54 = sphi 0, %s52
      %s55 = sphi 0, %s54
      %s69 = sphi 0, %s55
      %s77 = sphi 0, %s79
      %s80 = sphi 0, %s77
      %s81 = sphi 0, %s80
      %s97 = sphi 0, %s81
      %s105 = sphi 0, %s107
      %s108 = sphi 0, %s105
      %s109 = sphi 0, %s108
      %s125 = sphi 0, %s109
    $region4: #{tpu_custom_call.1} parent=1 // loop_header_branch
      %14 = sbr.rel (%p12) target = $region8
    $region5: #{tpu_custom_call.1} parent=1 // loop_body
      %s16 = ssub.s32 %s11, 1
      %s17 = ssub.s32 %s11, 2
      %s24 = sadd.s32 1, %s19
      %p25 = scmp.ge.s32.totalorder %s24, 1
      %s26 = scalar_select %p25, 0, %s24
      %s27 = sadd.s32 1, %s18
      %s28 = scalar_select %p25, %s27, %s18
      %p29 = scmp.ge.s32.totalorder %s28, 2
      %s30 = scalar_select %p29, 0, %s28
      %s32 = sadd.s32 %s31, 1
      %p35 = scmp.eq.s32.totalorder %s11, 1
      %p36 = scmp.ne.s32.totalorder %s31, %s33
      %p37 = scmp.eq.s32.totalorder %s11, 0
      %p38 = por %p36, %p37
      %p39 = scmp.ne.s32.totalorder %s31, %s33
      %p40 = scmp.eq.s32.totalorder %s16, 1
      %p41 = por %p39, %p40
      %p42 = scmp.ne.s32.totalorder %s33, %s34
      %p43 = scmp.eq.s32.totalorder %s16, 0
      %p44 = por %p42, %p43
      %p45 = scmp.ne.s32.totalorder %s33, %s34
      %p46 = scmp.eq.s32.totalorder %s17, 1
      %p47 = por %p45, %p46
      %p49 = scmp.ne.s32.totalorder %s34, %s48
      %p50 = scmp.eq.s32.totalorder %s17, 0
      %p51 = por %p49, %p50
      %s53 = sadd.s32 %s52, 1
      %p56 = scmp.eq.s32.totalorder %s11, 1
      %p57 = scmp.ne.s32.totalorder %s52, %s54
      %p58 = scmp.eq.s32.totalorder %s11, 0
      %p59 = por %p57, %p58
      %p60 = scmp.ne.s32.totalorder %s52, %s54
      %p61 = scmp.eq.s32.totalorder %s16, 1
      %p62 = por %p60, %p61
      %p63 = scmp.ne.s32.totalorder %s54, %s55
      %p64 = scmp.eq.s32.totalorder %s16, 0
      %p65 = por %p63, %p64
      %p66 = scmp.ne.s32.totalorder %s54, %s55
      %p67 = scmp.eq.s32.totalorder %s17, 1
      %p68 = por %p66, %p67
      %p70 = scmp.ne.s32.totalorder %s55, %s69
      %p71 = scmp.eq.s32.totalorder %s17, 0
      %p72 = por %p70, %p71
      %s73 = ssub.s32 %s18, %s30
      %s74 = ssub.s32 %s19, %s26
      %s75 = sor.u32 %s73, %s74
      %p76 = scmp.eq.s32.totalorder %s75, 0
      %s78 = sadd.s32 %s77, 1
      %s79 = scalar_select %p76, %s77, %s78
      %p82 = pneg %p76
      %p83 = scmp.eq.s32.totalorder %s11, 1
      %p84 = por %p82, %p83
      %p85 = scmp.ne.s32.totalorder %s77, %s80
      %p86 = scmp.eq.s32.totalorder %s11, 0
      %p87 = por %p85, %p86
      %p88 = scmp.ne.s32.totalorder %s77, %s80
      %p89 = scmp.eq.s32.totalorder %s16, 1
      %p90 = por %p88, %p89
      %p91 = scmp.ne.s32.totalorder %s80, %s81
      %p92 = scmp.eq.s32.totalorder %s16, 0
      %p93 = por %p91, %p92
      %p94 = scmp.ne.s32.totalorder %s80, %s81
      %p95 = scmp.eq.s32.totalorder %s17, 1
      %p96 = por %p94, %p95
      %p98 = scmp.ne.s32.totalorder %s81, %s97
      %p99 = scmp.eq.s32.totalorder %s17, 0
      %p100 = por %p98, %p99
      %s101 = ssub.s32 %s18, %s30
      %s102 = ssub.s32 %s19, %s26
      %s103 = sor.u32 %s101, %s102
      %p104 = scmp.eq.s32.totalorder %s103, 0
      %s106 = sadd.s32 %s105, 1
      %s107 = scalar_select %p104, %s105, %s106
      %p110 = pneg %p104
      %p111 = scmp.eq.s32.totalorder %s11, 1
      %p112 = por %p110, %p111
      %p113 = scmp.ne.s32.totalorder %s105, %s108
      %p114 = scmp.eq.s32.totalorder %s11, 0
      %p115 = por %p113, %p114
      %p116 = scmp.ne.s32.totalorder %s105, %s108
      %p117 = scmp.eq.s32.totalorder %s16, 1
      %p118 = por %p116, %p117
      %p119 = scmp.ne.s32.totalorder %s108, %s109
      %p120 = scmp.eq.s32.totalorder %s16, 0
      %p121 = por %p119, %p120
      %p122 = scmp.ne.s32.totalorder %s108, %s109
      %p123 = scmp.eq.s32.totalorder %s17, 1
      %p124 = por %p122, %p123
      %p126 = scmp.ne.s32.totalorder %s109, %s125
      %p127 = scmp.eq.s32.totalorder %s17, 0
      %p128 = por %p126, %p127
      %p129 = scmp.le.s32.totalorder 1, %s11
      %p130 = scmp.lt.s32.totalorder %s11, 3
      %p131 = pnand %p129, %p130
      %p132 = pneg %p131
      // Predicated region
      $region9: #{tpu_custom_call.1} parent=5 // pred_check
        _
      $region10: #{tpu_custom_call.1} parent=5 // pred_check_branch
        %134 = sbr.rel (%p131) target = $region12
      $region11: #{tpu_custom_call.1} parent=5 // pred_region
        %s135 = ssub.s32 %s11, 1
        // Predicated region
        $region13: #{tpu_custom_call.1} parent=11 // pred_check
          %p136 = pneg %p44
        $region14: #{tpu_custom_call.1} parent=11 // pred_check_branch
          %138 = sbr.rel (%p136) target = $region16
        $region15: #{tpu_custom_call.1} parent=11 // pred_region
          %s140 = ssub.s32 16, 16
          %141 = vsyncadd [#allocation3], %s140
          %s143 = sshll.u32 %s0, 4
          %s144 = int_to_ptr.vmem [resolvable:$true] %s143
          %146 = dma.vmem_to_smem %s144, 16, [#allocation2], [#allocation3]
        $region16: #{tpu_custom_call.1} parent=11 // pred_fallthru
          _
        // Predicated region
        $region17: #{tpu_custom_call.1} parent=11 // pred_check
          %p147 = pneg %p65
        $region18: #{tpu_custom_call.1} parent=11 // pred_check_branch
          %149 = sbr.rel (%p147) target = $region20
        $region19: #{tpu_custom_call.1} parent=11 // pred_region
          %s151 = ssub.s32 16, 16
          %152 = vsyncadd [#allocation5], %s151
          %s154 = sshll.u32 %s1, 4
          %s155 = int_to_ptr.vmem [resolvable:$true] %s154
          %157 = dma.vmem_to_smem %s155, 16, [#allocation4], [#allocation5]
        $region20: #{tpu_custom_call.1} parent=11 // pred_fallthru
          _
      $region12: #{tpu_custom_call.1} parent=5 // pred_fallthru
        _
      %p158 = scmp.lt.s32.totalorder %s11, 2
      // Predicated region
      $region21: #{tpu_custom_call.1} parent=5 // pred_check
        %p159 = pneg %p158
      $region22: #{tpu_custom_call.1} parent=5 // pred_check_branch
        %161 = sbr.rel (%p159) target = $region24
      $region23: #{tpu_custom_call.1} parent=5 // pred_region
        // Predicated region
        $region25: #{tpu_custom_call.1} parent=23 // pred_check
          %p162 = pneg %p87
        $region26: #{tpu_custom_call.1} parent=23 // pred_check_branch
          %164 = sbr.rel (%p162) target = $region28
        $region27: #{tpu_custom_call.1} parent=23 // pred_region
          %p165 = scmp.lt.s32.totalorder %s18, 1
          %s166 = scalar_select %p165, %s18, 1
          %p167 = scmp.lt.s32.totalorder %s19, 0
          %s168 = scalar_select %p167, %s19, 0
          %s169 = sadd.s32 %s168, %s166
          %s170 = smul.addr %s169, 4
          %s171 = scalar_lea.vmem %s2, %s170
        $region28: #{tpu_custom_call.1} parent=23 // pred_fallthru
          _
      $region24: #{tpu_custom_call.1} parent=5 // pred_fallthru
        _
      %p172 = scmp.le.s32.totalorder 1, %s11
      %p173 = scmp.lt.s32.totalorder %s11, 3
      %p174 = pnand %p172, %p173
      %p175 = pneg %p174
      // Predicated region
      $region29: #{tpu_custom_call.1} parent=5 // pred_check
        _
      $region30: #{tpu_custom_call.1} parent=5 // pred_check_branch
        %177 = sbr.rel (%p174) target = $region32
      $region31: #{tpu_custom_call.1} parent=5 // pred_region
        %s178 = ssub.s32 %s11, 1
        // Predicated region
        $region33: #{tpu_custom_call.1} parent=31 // pred_check
          %p179 = pneg %p44
        $region34: #{tpu_custom_call.1} parent=31 // pred_check_branch
          %181 = sbr.rel (%p179) target = $region36
        $region35: #{tpu_custom_call.1} parent=31 // pred_region
          %182 = dma.done [#allocation3], 16
        $region36: #{tpu_custom_call.1} parent=31 // pred_fallthru
          _
        // Predicated region
        $region37: #{tpu_custom_call.1} parent=31 // pred_check
          %p183 = pneg %p65
        $region38: #{tpu_custom_call.1} parent=31 // pred_check_branch
          %185 = sbr.rel (%p183) target = $region40
        $region39: #{tpu_custom_call.1} parent=31 // pred_region
          %186 = dma.done [#allocation5], 16
        $region40: #{tpu_custom_call.1} parent=31 // pred_fallthru
          _
        %187 = sfence
        %p188 = pneg %p44
        %p189 = pneg %p41
        %p190 = pneg %p65
        %p191 = pneg %p62
        %p192 = scmp.lt.s32.totalorder %s20, 1
        %s193 = scalar_select %p192, %s20, 1
        %p194 = scmp.lt.s32.totalorder %s21, 0
        %s195 = scalar_select %p194, %s21, 0
        %s196 = sadd.s32 %s195, %s193
        %s197 = smul.addr %s196, 4
        %s198 = scalar_lea.vmem %s2, %s197
        %p199 = pneg %p93
        %p200 = pneg %p90
        %p201 = pneg %p121
        %p202 = pneg %p118
        %p203 = scmp.lt.s32.totalorder %s20, 1
        %s204 = scalar_select %p203, %s20, 1
        %p205 = scmp.lt.s32.totalorder %s21, 0
        %s206 = scalar_select %p205, %s21, 0
        %s207 = sadd.s32 %s206, %s204
        %s208 = smul.addr %s207, 4
        %s209 = scalar_lea.vmem %s3, %s208
        %p210 = scmp.lt.s32.totalorder %s20, 1
        %s211 = scalar_select %p210, %s20, 1
        %p212 = scmp.lt.s32.totalorder %s21, 0
        %s213 = scalar_select %p212, %s21, 0
        %s214 = sadd.s32 %s213, %s211
        %s215 = smul.addr %s214, 4
        %s216 = scalar_lea.vmem %s2, %s215
        %p217 = scmp.lt.s32.totalorder %s20, 1
        %s218 = scalar_select %p217, %s20, 1
        %p219 = scmp.lt.s32.totalorder %s21, 0
        %s220 = scalar_select %p219, %s21, 0
        %s221 = sadd.s32 %s220, %s218
        %s222 = smul.addr %s221, 4
        %s223 = scalar_lea.vmem %s3, %s222
        %v224 = vld [vmem:[%s216] sm:$0x7]
        %s225 = sld [smem:[#allocation4]]
        %v226 = vstv %s225
        %s227 = sld [smem:[#allocation2]]
        %v228 = vstv %s227
        %v229 = vmul.f32 %v228, %v224
        %v230 = vadd.f32 %v226, %v229
        %s231 = sld [smem:[#allocation2 + $0x3]]
        %v232 = vstv %s231
        %v233 = vmul.f32 %v232, %v224
        %v235 = vrot.slane %v233, 1
        %v237 = vadd.f32 %v230, %v235
        %s238 = sld [smem:[#allocation2 + $0x6]]
        %v239 = vstv %s238
        %v240 = vmul.f32 %v239, %v224
        %v242 = vrot.slane %v240, 2
        %v244 = vadd.f32 %v237, %v242
        %s245 = sld [smem:[#allocation4 + $0x1]]
        %v246 = vstv %s245
        %s247 = sld [smem:[#allocation2 + $0x1]]
        %v248 = vstv %s247
        %v249 = vmul.f32 %v248, %v224
        %v250 = vadd.f32 %v246, %v249
        %s251 = sld [smem:[#allocation2 + $0x4]]
        %v252 = vstv %s251
        %v253 = vmul.f32 %v252, %v224
        %v255 = vrot.slane %v253, 1
        %v257 = vadd.f32 %v250, %v255
        %s258 = sld [smem:[#allocation2 + $0x7]]
        %v259 = vstv %s258
        %v260 = vmul.f32 %v259, %v224
        %v262 = vrot.slane %v260, 2
        %v264 = vadd.f32 %v257, %v262
        %s265 = sld [smem:[#allocation4 + $0x2]]
        %v266 = vstv %s265
        %s267 = sld [smem:[#allocation2 + $0x2]]
        %v268 = vstv %s267
        %v269 = vmul.f32 %v268, %v224
        %v270 = vadd.f32 %v266, %v269
        %s271 = sld [smem:[#allocation2 + $0x5]]
        %v272 = vstv %s271
        %v273 = vmul.f32 %v272, %v224
        %v275 = vrot.slane %v273, 1
        %v277 = vadd.f32 %v270, %v275
        %s278 = sld [smem:[#allocation2 + $0x8]]
        %v279 = vstv %s278
        %v280 = vmul.f32 %v279, %v224
        %v282 = vrot.slane %v280, 2
        %v284 = vadd.f32 %v277, %v282
        %v285 = vmax.f32 %v244, %v264
        %v286 = vmax.f32 %v285, %v284
        %v287 = vsub.f32 %v244, %v286
        %v288 = vmul.f32 %v287, 1.442695
        %v289 = vpow.pop %v288
        %v290 = vsub.f32 %v264, %v286
        %v291 = vmul.f32 %v290, 1.442695
        %v292 = vpow.pop %v291
        %v293 = vsub.f32 %v284, %v286
        %v294 = vmul.f32 %v293, 1.442695
        %v295 = vpow.pop %v294
        %v296 = vadd.f32 %v289, %v292
        %v297 = vadd.f32 %v296, %v295
        %v298 = vrcp.pop %v297
        %v299 = vmul.f32 %v289, %v298
        %v300 = vmul.f32 %v292, %v298
        %v301 = vmul.f32 %v295, %v298
        %v303 = vrot.slane %v300, 7
        %v306 = vrot.slane %v301, 6
        %vm308 = vcmask 1040384
        %v309 = vsel %vm308, %v299, %v303
        %vm310 = vcmask 1041408
        %v311 = vsel %vm310, %v309, %v306
        %312 = vst [vmem:[%s223] sm:$0x7] %v311
        %p313 = scmp.lt.s32.totalorder %s20, 1
        %s314 = scalar_select %p313, %s20, 1
        %p315 = scmp.lt.s32.totalorder %s21, 0
        %s316 = scalar_select %p315, %s21, 0
        %s317 = sadd.s32 %s316, %s314
        %s318 = smul.addr %s317, 4
        %s319 = scalar_lea.vmem %s3, %s318
        // Predicated region
        $region41: #{tpu_custom_call.1} parent=31 // pred_check
          %p320 = pneg %p118
        $region42: #{tpu_custom_call.1} parent=31 // pred_check_branch
          %322 = sbr.rel (%p320) target = $region44
        $region43: #{tpu_custom_call.1} parent=31 // pred_region
          _
        $region44: #{tpu_custom_call.1} parent=31 // pred_fallthru
          _
      $region32: #{tpu_custom_call.1} parent=5 // pred_fallthru
        _
      %p323 = scmp.le.s32.totalorder 2, %s11
      // Predicated region
      $region45: #{tpu_custom_call.1} parent=5 // pred_check
        %p324 = pneg %p323
      $region46: #{tpu_custom_call.1} parent=5 // pred_check_branch
        %326 = sbr.rel (%p324) target = $region48
      $region47: #{tpu_custom_call.1} parent=5 // pred_region
        %s327 = ssub.s32 %s11, 2
        // Predicated region
        $region49: #{tpu_custom_call.1} parent=47 // pred_check
          %p328 = pneg %p124
        $region50: #{tpu_custom_call.1} parent=47 // pred_check_branch
          %330 = sbr.rel (%p328) target = $region52
        $region51: #{tpu_custom_call.1} parent=47 // pred_region
          %p331 = scmp.lt.s32.totalorder %s22, 1
          %s332 = scalar_select %p331, %s22, 1
          %p333 = scmp.lt.s32.totalorder %s23, 0
          %s334 = scalar_select %p333, %s23, 0
          %s335 = sadd.s32 %s334, %s332
          %s336 = smul.addr %s335, 4
          %s337 = scalar_lea.vmem %s3, %s336
        $region52: #{tpu_custom_call.1} parent=47 // pred_fallthru
          _
      $region48: #{tpu_custom_call.1} parent=5 // pred_fallthru
        _
    $region6: #{tpu_custom_call.1} parent=1 // loop_footer
      %s15 = sadd.s32 1, %s11
    $region7: #{tpu_custom_call.1} parent=1 // loop_footer_branch
      %10 = sbr.rel target = $region3
    $region8: #{tpu_custom_call.1} parent=1 // loop_exit
      _
    %338 = vsyncpa [#allocation3], 1
    %s339 = scalar_lea.sflag [#allocation3], 1
    %340 = vsyncpa %s339, 1
    %341 = vsyncpa [#allocation5], 1

</llo_original>
